<compile_context>
chip_gen: v5e
topology: v5e:2x2
jax: 0.10.0
libtpu: 0.0.40
codegen_flags: <defaults>
</compile_context>

<pallas_src>
import functools

import jax
import jax.numpy as jnp
from jax import lax
from jax.experimental import pallas as pl
from jax.experimental.pallas import tpu as pltpu


def _round_up(x, m):
    return ((x + m - 1) // m) * m


def _vmem_capacity_bytes():
    try:
        return int(pltpu.get_tpu_info().vmem_capacity_bytes)
    except Exception:
        return 64 * 1024 * 1024  # conservative default (v7x per-TC VMEM)


# --------------------------------------------------------------------------
# Fast path: whole graph resident in VMEM, all K sweeps in one kernel.
# --------------------------------------------------------------------------
def _fused_kernel(adj_ref, feat_ref, norm_ref, out_ref, *, k, alpha):
    """out = APPNP^K(feat).  norm already carries the sqrt(1 - alpha) factor,
    so each sweep is  H <- n ⊙ (A (n ⊙ H)) + alpha * H0."""
    out_ref[...] = feat_ref[...]

    @pl.loop(0, k)
    def _(t):
        n = norm_ref[...]                                    # (N, 1) f32
        h_scaled = (n * out_ref[...]).astype(jnp.bfloat16)   # column-side norm
        prop = jnp.dot(adj_ref[...], h_scaled,               # bf16 x bf16 MXU
                       preferred_element_type=jnp.float32)   # f32 accumulate
        out_ref[...] = n * prop + jnp.float32(alpha) * feat_ref[...]


# --------------------------------------------------------------------------
# Tiled path: one propagation sweep, grid = (row tiles, F tiles, reduction).
# --------------------------------------------------------------------------
def _prop_kernel(adj_ref, h_ref, ncol_ref, nrow_ref, h0_ref, out_ref,
                 acc_ref, *, alpha):
    """One APPNP sweep, one (row, F) output tile:

        out = nrow ⊙ (A @ (ncol ⊙ H)) + alpha * H0

    where nrow/ncol already carry the sqrt(1 - alpha) factor.
    """
    r = pl.program_id(2)

    @pl.when(r == 0)
    def _():
        acc_ref[...] = jnp.zeros_like(acc_ref)

    # adj is bf16; keep the MXU in bf16 x bf16 (f32 accumulation).
    h_scaled = (ncol_ref[...] * h_ref[...].astype(jnp.float32)
                ).astype(jnp.bfloat16)                       # (tk, tf)
    acc_ref[...] += jnp.dot(adj_ref[...], h_scaled,
                            preferred_element_type=jnp.float32)

    @pl.when(r == pl.num_programs(2) - 1)
    def _():
        out_ref[...] = (nrow_ref[...] * acc_ref[...]
                        + jnp.float32(alpha) * h0_ref[...]).astype(out_ref.dtype)


def appnp_conv(adj, feat, *, k, alpha, edge_drop=0.0, force_tiled=False):
    """APPNP propagation.

    adj  : (N, N) with adj[i, j] = 1.0 iff there is an edge j -> i
           (so in_degree(i) = sum_j adj[i, j]).
    feat : (N, F) node features.
    """
    if edge_drop != 0.0:
        # TODO(synk): edge_drop (nn.Dropout on messages) not implemented; it is
        # the identity for rate 0.0 / eval mode.
        raise NotImplementedError("edge_drop > 0 is not supported")

    N = adj.shape[0]
    F = feat.shape[1]
    out_dtype = feat.dtype

    if k == 0:
        return feat

    vmem_cap = _vmem_capacity_bytes()

    # Normalization vector (sqrt(1 - alpha) folded in); degrees computed in
    # the wrapper so XLA fuses the row-sum with the pad / bf16 cast of adj.
    scale = float((1.0 - alpha) ** 0.5)
    deg = jnp.sum(adj.astype(jnp.float32), axis=1)           # in-degree
    norm = scale * lax.rsqrt(jnp.maximum(deg, 1.0))          # (N,)

    LANE = 128
    # v6e/v7x MXUs are 256 wide: pad wide feature dims to a multiple of 256.
    f_pad = _round_up(max(F, LANE), 256 if F > LANE else LANE)

    # ---- fast path: adjacency + features fit in VMEM ------------------------
    n_fast = _round_up(max(N, 8), LANE)
    fast_vmem_est = (2 * n_fast * n_fast          # adj bf16
                     + 6 * 4 * n_fast * f_pad     # feat / out / temporaries
                     + 8 * n_fast)                # norm
    if not force_tiled and fast_vmem_est <= int(0.55 * vmem_cap):
        adj_p = jnp.zeros((n_fast, n_fast), jnp.bfloat16)
        adj_p = adj_p.at[:N, :N].set(adj.astype(jnp.bfloat16))
        feat_p = jnp.zeros((n_fast, f_pad), jnp.float32)
        feat_p = feat_p.at[:N, :F].set(feat.astype(jnp.float32))
        norm_p = jnp.zeros((n_fast, 1), jnp.float32).at[:N, 0].set(norm)

        out_p = pl.pallas_call(
            functools.partial(_fused_kernel, k=int(k), alpha=float(alpha)),
            out_shape=jax.ShapeDtypeStruct((n_fast, f_pad), jnp.float32),
            compiler_params=pltpu.CompilerParams(
                vmem_limit_bytes=min(int(0.85 * vmem_cap), 112 * 1024 * 1024)),
        )(adj_p, feat_p, norm_p)
        return out_p[:N, :F].astype(out_dtype)

    # ---- tiled path: K chained sweeps, H ping-pongs through HBM -------------
    tm = tk = min(1024, _round_up(max(N, 8), LANE))
    n_pad = _round_up(N, tm)
    if f_pad > 512:
        f_pad = _round_up(f_pad, 512)
        tf = 512
    else:
        tf = f_pad

    adj_p = jnp.zeros((n_pad, n_pad), jnp.bfloat16)
    adj_p = adj_p.at[:N, :N].set(adj.astype(jnp.bfloat16))
    feat_p = jnp.zeros((n_pad, f_pad), jnp.float32)
    feat_p = feat_p.at[:N, :F].set(feat.astype(jnp.float32))
    norm_p = jnp.zeros((n_pad, 1), jnp.float32).at[:N, 0].set(norm)

    n_row = n_pad // tm
    n_f = f_pad // tf
    n_red = n_pad // tk

    def make_prop(out_dt):
        return pl.pallas_call(
            functools.partial(_prop_kernel, alpha=float(alpha)),
            out_shape=jax.ShapeDtypeStruct((n_pad, f_pad), out_dt),
            grid=(n_row, n_f, n_red),
            in_specs=[
                pl.BlockSpec((tm, tk), lambda i, j, r: (i, r)),   # adj (bf16)
                pl.BlockSpec((tk, tf), lambda i, j, r: (r, j)),   # H^t (bf16)
                pl.BlockSpec((tk, 1), lambda i, j, r: (r, 0)),    # norm @ cols
                pl.BlockSpec((tm, 1), lambda i, j, r: (i, 0)),    # norm @ rows
                pl.BlockSpec((tm, tf), lambda i, j, r: (i, j)),   # H^0 (f32)
            ],
            out_specs=pl.BlockSpec((tm, tf), lambda i, j, r: (i, j)),
            scratch_shapes=[pltpu.VMEM((tm, tf), jnp.float32)],
            compiler_params=pltpu.CompilerParams(
                dimension_semantics=("parallel", "parallel", "arbitrary"),
                vmem_limit_bytes=min(int(0.7 * vmem_cap), 96 * 1024 * 1024)),
        )

    prop_last = make_prop(jnp.float32)
    prop_mid = make_prop(jnp.bfloat16) if k > 1 else None

    # Intermediate H lives in HBM as bf16 (halves H read/write traffic); the
    # final sweep writes f32.
    h = feat_p.astype(jnp.bfloat16)
    for t in range(k):
        p = prop_last if t == k - 1 else prop_mid
        h = p(adj_p, h, norm_p, norm_p, feat_p)

    return h[:N, :F].astype(out_dtype)


def appnp_reference(adj, feat, *, k, alpha):
    """Pure-JAX f32 reference for correctness checking."""
    deg = jnp.sum(adj, axis=1, keepdims=True)
    norm = jnp.power(jnp.maximum(deg, 1.0), -0.5)
    a_hat = norm * adj * norm.T
    h0 = feat
    h = feat
    for _ in range(k):
        h = (1.0 - alpha) * (a_hat @ h) + alpha * h0
    return h


if __name__ == "__main__":
    key = jax.random.PRNGKey(0)
    k_adj, k_feat = jax.random.split(key)

    N = 128   # number of nodes
    F = 32    # feature dim (the "*" in (N, *)); padded to 128 inside
    K = 3     # propagation steps
    ALPHA = 0.1

    # Deterministic synthetic graph: ~10% edge density, no self loops.
    adj = (jax.random.uniform(k_adj, (N, N)) < 0.1).astype(jnp.float32)
    adj = adj * (1.0 - jnp.eye(N, dtype=jnp.float32))

    feat = jax.random.normal(k_feat, (N, F), dtype=jnp.float32)

    ref = appnp_reference(adj, feat, k=K, alpha=ALPHA)

    # Fast (VMEM-resident, fused K-loop) path.
    run = jax.jit(functools.partial(appnp_conv, k=K, alpha=ALPHA))
    out = jax.block_until_ready(run(adj, feat))
    assert out.shape == (N, F)
    # bf16 MXU operands (f32 accumulation) -> bf16-level tolerance vs f32 ref.
    assert jnp.allclose(out, ref, atol=2e-2, rtol=2e-2), "fast path mismatch"

    # Tiled (chained-sweep) path, forced so it is exercised too.
    run_tiled = jax.jit(
        functools.partial(appnp_conv, k=K, alpha=ALPHA, force_tiled=True))
    out_t = jax.block_until_ready(run_tiled(adj, feat))
    assert out_t.shape == (N, F)
    assert jnp.allclose(out_t, ref, atol=2e-2, rtol=2e-2), "tiled path mismatch"

    print("KERNEL_OK")
</pallas_src>

<mosaic_0001>
module attributes {stable_mosaic.version = 11 : i64} {
  func.func @_fused_kernel(%arg0: memref<128x128xbf16, #tpu.memory_space<vmem>>, %arg1: memref<128x128xf32, #tpu.memory_space<vmem>>, %arg2: memref<128x1xf32, #tpu.memory_space<vmem>>, %arg3: memref<128x128xf32, #tpu.memory_space<vmem>>) attributes {dimension_semantics = [], scalar_prefetch = 0 : i64, scratch_operands = 0 : i64, tpu.core_type = #tpu.core_type<tc>} {
    %c0 = arith.constant 0 : index
    %c0_0 = arith.constant 0 : index
    %0 = vector.load %arg1[%c0, %c0_0] : memref<128x128xf32, #tpu.memory_space<vmem>>, vector<128x128xf32>
    %c0_1 = arith.constant 0 : index
    %c0_2 = arith.constant 0 : index
    %1 = vector.load %arg3[%c0_1, %c0_2] : memref<128x128xf32, #tpu.memory_space<vmem>>, vector<128x128xf32>
    tpu.vector_store %arg3[%c0_1, %c0_2], %0 {strides = array<i32>} : memref<128x128xf32, #tpu.memory_space<vmem>>, vector<128x128xf32>,
    %c0_i32 = arith.constant 0 : i32
    %c3_i32 = arith.constant 3 : i32
    %2 = arith.addi %c0_i32, %c3_i32 : i32
    %c1_i32 = arith.constant 1 : i32
    scf.for %arg4 = %c0_i32 to %2 step %c1_i32  : i32 {
      %c0_3 = arith.constant 0 : index
      %c0_4 = arith.constant 0 : index
      %3 = vector.load %arg2[%c0_3, %c0_4] : memref<128x1xf32, #tpu.memory_space<vmem>>, vector<128x1xf32>
      %c0_5 = arith.constant 0 : index
      %c0_6 = arith.constant 0 : index
      %4 = vector.load %arg3[%c0_5, %c0_6] : memref<128x128xf32, #tpu.memory_space<vmem>>, vector<128x128xf32>
      %5 = vector.broadcast %3 : vector<128x1xf32> to vector<128x128xf32>
      %6 = arith.mulf %5, %4 : vector<128x128xf32>
      %7 = arith.truncf %6 : vector<128x128xf32> to vector<128x128xbf16>
      %c0_7 = arith.constant 0 : index
      %c0_8 = arith.constant 0 : index
      %8 = vector.load %arg0[%c0_7, %c0_8] : memref<128x128xbf16, #tpu.memory_space<vmem>>, vector<128x128xbf16>
      %cst = arith.constant dense<0.000000e+00> : vector<128x128xf32>
      %9 = tpu.matmul %8, %7, %cst {dimension_numbers = #tpu.dot_dimension_numbers<[1], [0], [0], [1], [0, 0, 1, 1], [], []>} : vector<128x128xbf16>, vector<128x128xbf16>, vector<128x128xf32> -> vector<128x128xf32>
      %10 = vector.broadcast %3 : vector<128x1xf32> to vector<128x128xf32>
      %11 = arith.mulf %10, %9 : vector<128x128xf32>
      %c0_9 = arith.constant 0 : index
      %c0_10 = arith.constant 0 : index
      %12 = vector.load %arg1[%c0_9, %c0_10] : memref<128x128xf32, #tpu.memory_space<vmem>>, vector<128x128xf32>
      %cst_11 = arith.constant 1.000000e-01 : f32
      %13 = vector.broadcast %cst_11 : f32 to vector<128x128xf32>
      %14 = arith.mulf %13, %12 : vector<128x128xf32>
      %15 = arith.addf %11, %14 : vector<128x128xf32>
      %c0_12 = arith.constant 0 : index
      %c0_13 = arith.constant 0 : index
      %16 = vector.load %arg3[%c0_12, %c0_13] : memref<128x128xf32, #tpu.memory_space<vmem>>, vector<128x128xf32>
      tpu.vector_store %arg3[%c0_12, %c0_13], %15 {strides = array<i32>} : memref<128x128xf32, #tpu.memory_space<vmem>>, vector<128x128xf32>,
    }
    return
  }
}

</mosaic_0001>

<llo_original>
// kernel: appnp_conv.1
$region0: #{appnp_conv.1}
  #allocation0 [shape = 'u32[]', space=smem, size = 0x4, offset = 0x4, fixed_abs, tag = 'smem constant byte address 0x4 - core index']
  #allocation1 [shape = 'u32[72,128]{1,0:T(1,128)}', space=vmem, size = 0x9000, scoped, tag = 'internal scratch']
  %s0 = inlined_call_operand.vmem [shape: bf16[128,128], index: 0, kind: input, shape index: {}]
  %s1 = inlined_call_operand.vmem [shape: f32[128,128], index: 1, kind: input, shape index: {}]
  %s2 = inlined_call_operand.vmem [shape: f32[128,1], index: 2, kind: input, shape index: {}]
  %s3 = inlined_call_operand.vmem [shape: f32[128,128], index: 3, kind: output, shape index: {}]
  %s4 = sld [smem:[#allocation0]]
  $region29: #{appnp_conv.1} parent=0
    _
  %s6 = ssub.s32 1, %s4
  %s7 = scalar_select 0, %s6, %s4
  // Predicated region
  $region2: #{appnp_conv.1} parent=0 // pred_check
    _
  $region3: #{appnp_conv.1} parent=0 // pred_check_branch
    %9 = sbr.rel (0) target = $region5
  $region4: #{appnp_conv.1} parent=0 // pred_region
    _
  $region5: #{appnp_conv.1} parent=0 // pred_fallthru
    _
  // Predicated region
  $region6: #{appnp_conv.1} parent=0 // pred_check
    _
  $region7: #{appnp_conv.1} parent=0 // pred_check_branch
    %11 = sbr.rel (0) target = $region9
  $region8: #{appnp_conv.1} parent=0 // pred_region
    _
  $region9: #{appnp_conv.1} parent=0 // pred_fallthru
    _
  // Predicated region
  $region10: #{appnp_conv.1} parent=0 // pred_check
    _
  $region11: #{appnp_conv.1} parent=0 // pred_check_branch
    %13 = sbr.rel (0) target = $region13
  $region12: #{appnp_conv.1} parent=0 // pred_region
    _
  $region13: #{appnp_conv.1} parent=0 // pred_fallthru
    _
  %v14 = vld [vmem:[%s1] sm:$0xff]
  %v15 = vld [vmem:[%s1 + $0x8] sm:$0xff]
  %v16 = vld [vmem:[%s1 + $0x10] sm:$0xff]
  %v17 = vld [vmem:[%s1 + $0x18] sm:$0xff]
  %v18 = vld [vmem:[%s1 + $0x20] sm:$0xff]
  %v19 = vld [vmem:[%s1 + $0x28] sm:$0xff]
  %v20 = vld [vmem:[%s1 + $0x30] sm:$0xff]
  %v21 = vld [vmem:[%s1 + $0x38] sm:$0xff]
  %v22 = vld [vmem:[%s1 + $0x40] sm:$0xff]
  %v23 = vld [vmem:[%s1 + $0x48] sm:$0xff]
  %v24 = vld [vmem:[%s1 + $0x50] sm:$0xff]
  %v25 = vld [vmem:[%s1 + $0x58] sm:$0xff]
  %v26 = vld [vmem:[%s1 + $0x60] sm:$0xff]
  %v27 = vld [vmem:[%s1 + $0x68] sm:$0xff]
  %v28 = vld [vmem:[%s1 + $0x70] sm:$0xff]
  %v29 = vld [vmem:[%s1 + $0x78] sm:$0xff]
  %30 = vst [vmem:[%s3] sm:$0xff] %v14
  %31 = vst [vmem:[%s3 + $0x8] sm:$0xff] %v15
  %32 = vst [vmem:[%s3 + $0x10] sm:$0xff] %v16
  %33 = vst [vmem:[%s3 + $0x18] sm:$0xff] %v17
  %34 = vst [vmem:[%s3 + $0x20] sm:$0xff] %v18
  %35 = vst [vmem:[%s3 + $0x28] sm:$0xff] %v19
  %36 = vst [vmem:[%s3 + $0x30] sm:$0xff] %v20
  %37 = vst [vmem:[%s3 + $0x38] sm:$0xff] %v21
  %38 = vst [vmem:[%s3 + $0x40] sm:$0xff] %v22
  %39 = vst [vmem:[%s3 + $0x48] sm:$0xff] %v23
  %40 = vst [vmem:[%s3 + $0x50] sm:$0xff] %v24
  %41 = vst [vmem:[%s3 + $0x58] sm:$0xff] %v25
  %42 = vst [vmem:[%s3 + $0x60] sm:$0xff] %v26
  %43 = vst [vmem:[%s3 + $0x68] sm:$0xff] %v27
  %44 = vst [vmem:[%s3 + $0x70] sm:$0xff] %v28
  %45 = vst [vmem:[%s3 + $0x78] sm:$0xff] %v29
  loop: start=0, step=1, limit=3
  $region14: #{appnp_conv.1} parent=0 // loop_pre_header
    _
  $region15: #{appnp_conv.1} parent=0 // loop_header
    %s47 = sphi 0, %s51
    %p48 = scmp.ge.s32.totalorder %s47, 3
  $region16: #{appnp_conv.1} parent=0 // loop_header_branch
    %50 = sbr.rel (%p48) target = $region20
  $region17: #{appnp_conv.1} parent=0 // loop_body
    %v52 = vld [vmem:[%s2] sm:$0xff]
    %v53 = vld [vmem:[%s2 + $0x8] sm:$0xff]
    %v54 = vld [vmem:[%s2 + $0x10] sm:$0xff]
    %v55 = vld [vmem:[%s2 + $0x18] sm:$0xff]
    %v56 = vld [vmem:[%s2 + $0x20] sm:$0xff]
    %v57 = vld [vmem:[%s2 + $0x28] sm:$0xff]
    %v58 = vld [vmem:[%s2 + $0x30] sm:$0xff]
    %v59 = vld [vmem:[%s2 + $0x38] sm:$0xff]
    %v60 = vld [vmem:[%s2 + $0x40] sm:$0xff]
    %v61 = vld [vmem:[%s2 + $0x48] sm:$0xff]
    %v62 = vld [vmem:[%s2 + $0x50] sm:$0xff]
    %v63 = vld [vmem:[%s2 + $0x58] sm:$0xff]
    %v64 = vld [vmem:[%s2 + $0x60] sm:$0xff]
    %v65 = vld [vmem:[%s2 + $0x68] sm:$0xff]
    %v66 = vld [vmem:[%s2 + $0x70] sm:$0xff]
    %v67 = vld [vmem:[%s2 + $0x78] sm:$0xff]
    %v68 = vld [vmem:[%s3] sm:$0xff]
    %v69 = vld [vmem:[%s3 + $0x8] sm:$0xff]
    %v70 = vld [vmem:[%s3 + $0x10] sm:$0xff]
    %v71 = vld [vmem:[%s3 + $0x18] sm:$0xff]
    %v72 = vld [vmem:[%s3 + $0x20] sm:$0xff]
    %v73 = vld [vmem:[%s3 + $0x28] sm:$0xff]
    %v74 = vld [vmem:[%s3 + $0x30] sm:$0xff]
    %v75 = vld [vmem:[%s3 + $0x38] sm:$0xff]
    %v76 = vld [vmem:[%s3 + $0x40] sm:$0xff]
    %v77 = vld [vmem:[%s3 + $0x48] sm:$0xff]
    %v78 = vld [vmem:[%s3 + $0x50] sm:$0xff]
    %v79 = vld [vmem:[%s3 + $0x58] sm:$0xff]
    %v80 = vld [vmem:[%s3 + $0x60] sm:$0xff]
    %v81 = vld [vmem:[%s3 + $0x68] sm:$0xff]
    %v82 = vld [vmem:[%s3 + $0x70] sm:$0xff]
    %v83 = vld [vmem:[%s3 + $0x78] sm:$0xff]
    %85 = vset.pattern.permute.xlu0 0
    %86 = vperm.xlu0 %85, %v52
    %v87 = vpop.permute.xlu0 %86
    %90 = vset.pattern.permute.xlu0 0
    %91 = vperm.xlu0 %90, %v53
    %v92 = vpop.permute.xlu0 %91
    %95 = vset.pattern.permute.xlu0 0
    %96 = vperm.xlu0 %95, %v54
    %v97 = vpop.permute.xlu0 %96
    %100 = vset.pattern.permute.xlu0 0
    %101 = vperm.xlu0 %100, %v55
    %v102 = vpop.permute.xlu0 %101
    %105 = vset.pattern.permute.xlu0 0
    %106 = vperm.xlu0 %105, %v56
    %v107 = vpop.permute.xlu0 %106
    %110 = vset.pattern.permute.xlu0 0
    %111 = vperm.xlu0 %110, %v57
    %v112 = vpop.permute.xlu0 %111
    %115 = vset.pattern.permute.xlu0 0
    %116 = vperm.xlu0 %115, %v58
    %v117 = vpop.permute.xlu0 %116
    %120 = vset.pattern.permute.xlu0 0
    %121 = vperm.xlu0 %120, %v59
    %v122 = vpop.permute.xlu0 %121
    %125 = vset.pattern.permute.xlu0 0
    %126 = vperm.xlu0 %125, %v60
    %v127 = vpop.permute.xlu0 %126
    %130 = vset.pattern.permute.xlu0 0
    %131 = vperm.xlu0 %130, %v61
    %v132 = vpop.permute.xlu0 %131
    %135 = vset.pattern.permute.xlu0 0
    %136 = vperm.xlu0 %135, %v62
    %v137 = vpop.permute.xlu0 %136
    %140 = vset.pattern.permute.xlu0 0
    %141 = vperm.xlu0 %140, %v63
    %v142 = vpop.permute.xlu0 %141
    %145 = vset.pattern.permute.xlu0 0
    %146 = vperm.xlu0 %145, %v64
    %v147 = vpop.permute.xlu0 %146
    %150 = vset.pattern.permute.xlu0 0
    %151 = vperm.xlu0 %150, %v65
    %v152 = vpop.permute.xlu0 %151
    %155 = vset.pattern.permute.xlu0 0
    %156 = vperm.xlu0 %155, %v66
    %v157 = vpop.permute.xlu0 %156
    %160 = vset.pattern.permute.xlu0 0
    %161 = vperm.xlu0 %160, %v67
    %v162 = vpop.permute.xlu0 %161
    %v164 = vmul.f32 %v87, %v68
    %v165 = vmul.f32 %v92, %v69
    %v166 = vmul.f32 %v97, %v70
    %v167 = vmul.f32 %v102, %v71
    %v168 = vmul.f32 %v107, %v72
    %v169 = vmul.f32 %v112, %v73
    %v170 = vmul.f32 %v117, %v74
    %v171 = vmul.f32 %v122, %v75
    %v172 = vmul.f32 %v127, %v76
    %v173 = vmul.f32 %v132, %v77
    %v174 = vmul.f32 %v137, %v78
    %v175 = vmul.f32 %v142, %v79
    %v176 = vmul.f32 %v147, %v80
    %v177 = vmul.f32 %v152, %v81
    %v178 = vmul.f32 %v157, %v82
    %v179 = vmul.f32 %v162, %v83
    %v180 = vpack.c.bf16 %v165, %v164
    %v181 = vpack.c.bf16 %v167, %v166
    %v182 = vpack.c.bf16 %v169, %v168
    %v183 = vpack.c.bf16 %v171, %v170
    %v184 = vpack.c.bf16 %v173, %v172
    %v185 = vpack.c.bf16 %v175, %v174
    %v186 = vpack.c.bf16 %v177, %v176
    %v187 = vpack.c.bf16 %v179, %v178
    %v188 = vld [vmem:[%s0] sm:$0xf]
    %v189 = vld [vmem:[%s0 + $0x4] sm:$0xf]
    %v190 = vld [vmem:[%s0 + $0x8] sm:$0xf]
    %v191 = vld [vmem:[%s0 + $0xc] sm:$0xf]
    %v192 = vld [vmem:[%s0 + $0x10] sm:$0xf]
    %v193 = vld [vmem:[%s0 + $0x14] sm:$0xf]
    %v194 = vld [vmem:[%s0 + $0x18] sm:$0xf]
    %v195 = vld [vmem:[%s0 + $0x1c] sm:$0xf]
    %v196 = vld [vmem:[%s0 + $0x20] sm:$0xf]
    %v197 = vld [vmem:[%s0 + $0x24] sm:$0xf]
    %v198 = vld [vmem:[%s0 + $0x28] sm:$0xf]
    %v199 = vld [vmem:[%s0 + $0x2c] sm:$0xf]
    %v200 = vld [vmem:[%s0 + $0x30] sm:$0xf]
    %v201 = vld [vmem:[%s0 + $0x34] sm:$0xf]
    %v202 = vld [vmem:[%s0 + $0x38] sm:$0xf]
    %v203 = vld [vmem:[%s0 + $0x3c] sm:$0xf]
    %v220 = vunpack.c.l.b16 %v188
    %v221 = vunpack.c.l.b16 %v189
    %v222 = vunpack.c.l.b16 %v190
    %v223 = vunpack.c.l.b16 %v191
    %v224 = vunpack.c.l.b16 %v192
    %v225 = vunpack.c.l.b16 %v193
    %v226 = vunpack.c.l.b16 %v194
    %v227 = vunpack.c.l.b16 %v195
    %v228 = vunpack.c.l.b16 %v196
    %v229 = vunpack.c.l.b16 %v197
    %v230 = vunpack.c.l.b16 %v198
    %v231 = vunpack.c.l.b16 %v199
    %v232 = vunpack.c.l.b16 %v200
    %v233 = vunpack.c.l.b16 %v201
    %v234 = vunpack.c.l.b16 %v202
    %v235 = vunpack.c.l.b16 %v203
    %v236 = vpack.c.b16 %v221, %v220
    %v237 = vpack.c.b16 %v223, %v222
    %v238 = vpack.c.b16 %v225, %v224
    %v239 = vpack.c.b16 %v227, %v226
    %v240 = vpack.c.b16 %v229, %v228
    %v241 = vpack.c.b16 %v231, %v230
    %v242 = vpack.c.b16 %v233, %v232
    %v243 = vpack.c.b16 %v235, %v234
    %252 = vmatpush.bf16.msra.mxu0 %v187
    %253 = vmatpush.bf16.msra.mxu0 %v186
    %254 = vmatpush.bf16.msra.mxu0 %v185
    %255 = vmatpush.bf16.msra.mxu0 %v184
    %256 = vmatpush.bf16.msra.mxu0 %v183
    %257 = vmatpush.bf16.msra.mxu0 %v182
    %258 = vmatpush.bf16.msra.mxu0 %v181
    %259 = vmatpush.bf16.msra.mxu0 %v180
    %260 = vmatmul.bf16.gmra.mxu0 %v236
    %v261 = vpop.f32.mrf.mxu0
    %v262 = vadd.f32 0.0, %v261
    %v263 = vpop.f32.mrf.mxu0
    %v264 = vadd.f32 0.0, %v263
    %265 = vmatmul.bf16.gmra.mxu0 %v237
    %v266 = vpop.f32.mrf.mxu0
    %v267 = vadd.f32 0.0, %v266
    %v268 = vpop.f32.mrf.mxu0
    %v269 = vadd.f32 0.0, %v268
    %270 = vmatmul.bf16.gmra.mxu0 %v238
    %v271 = vpop.f32.mrf.mxu0
    %v272 = vadd.f32 0.0, %v271
    %v273 = vpop.f32.mrf.mxu0
    %v274 = vadd.f32 0.0, %v273
    %275 = vmatmul.bf16.gmra.mxu0 %v239
    %v276 = vpop.f32.mrf.mxu0
    %v277 = vadd.f32 0.0, %v276
    %v278 = vpop.f32.mrf.mxu0
    %v279 = vadd.f32 0.0, %v278
    %280 = vmatmul.bf16.gmra.mxu0 %v240
    %v281 = vpop.f32.mrf.mxu0
    %v282 = vadd.f32 0.0, %v281
    %v283 = vpop.f32.mrf.mxu0
    %v284 = vadd.f32 0.0, %v283
    %285 = vmatmul.bf16.gmra.mxu0 %v241
    %v286 = vpop.f32.mrf.mxu0
    %v287 = vadd.f32 0.0, %v286
    %v288 = vpop.f32.mrf.mxu0
    %v289 = vadd.f32 0.0, %v288
    %290 = vmatmul.bf16.gmra.mxu0 %v242
    %v291 = vpop.f32.mrf.mxu0
    %v292 = vadd.f32 0.0, %v291
    %v293 = vpop.f32.mrf.mxu0
    %v294 = vadd.f32 0.0, %v293
    %295 = vmatmul.bf16.gmra.mxu0 %v243
    %v296 = vpop.f32.mrf.mxu0
    %v297 = vadd.f32 0.0, %v296
    %v298 = vpop.f32.mrf.mxu0
    %v299 = vadd.f32 0.0, %v298
    %300 = vdwg.mxu0
    %v301 = vmul.f32 %v87, %v262
    %v302 = vmul.f32 %v92, %v264
    %v303 = vmul.f32 %v97, %v267
    %v304 = vmul.f32 %v102, %v269
    %v305 = vmul.f32 %v107, %v272
    %v306 = vmul.f32 %v112, %v274
    %v307 = vmul.f32 %v117, %v277
    %v308 = vmul.f32 %v122, %v279
    %v309 = vmul.f32 %v127, %v282
    %v310 = vmul.f32 %v132, %v284
    %v311 = vmul.f32 %v137, %v287
    %v312 = vmul.f32 %v142, %v289
    %v313 = vmul.f32 %v147, %v292
    %v314 = vmul.f32 %v152, %v294
    %v315 = vmul.f32 %v157, %v297
    %v316 = vmul.f32 %v162, %v299
    %v317 = vld [vmem:[%s1] sm:$0xff]
    %v318 = vld [vmem:[%s1 + $0x8] sm:$0xff]
    %v319 = vld [vmem:[%s1 + $0x10] sm:$0xff]
    %v320 = vld [vmem:[%s1 + $0x18] sm:$0xff]
    %v321 = vld [vmem:[%s1 + $0x20] sm:$0xff]
    %v322 = vld [vmem:[%s1 + $0x28] sm:$0xff]
    %v323 = vld [vmem:[%s1 + $0x30] sm:$0xff]
    %v324 = vld [vmem:[%s1 + $0x38] sm:$0xff]
    %v325 = vld [vmem:[%s1 + $0x40] sm:$0xff]
    %v326 = vld [vmem:[%s1 + $0x48] sm:$0xff]
    %v327 = vld [vmem:[%s1 + $0x50] sm:$0xff]
    %v328 = vld [vmem:[%s1 + $0x58] sm:$0xff]
    %v329 = vld [vmem:[%s1 + $0x60] sm:$0xff]
    %v330 = vld [vmem:[%s1 + $0x68] sm:$0xff]
    %v331 = vld [vmem:[%s1 + $0x70] sm:$0xff]
    %v332 = vld [vmem:[%s1 + $0x78] sm:$0xff]
    %v333 = vmul.f32 %v317, 0.1
    %v334 = vmul.f32 %v318, 0.1
    %v335 = vmul.f32 %v319, 0.1
    %v336 = vmul.f32 %v320, 0.1
    %v337 = vmul.f32 %v321, 0.1
    %v338 = vmul.f32 %v322, 0.1
    %v339 = vmul.f32 %v323, 0.1
    %v340 = vmul.f32 %v324, 0.1
    %v341 = vmul.f32 %v325, 0.1
    %v342 = vmul.f32 %v326, 0.1
    %v343 = vmul.f32 %v327, 0.1
    %v344 = vmul.f32 %v328, 0.1
    %v345 = vmul.f32 %v329, 0.1
    %v346 = vmul.f32 %v330, 0.1
    %v347 = vmul.f32 %v331, 0.1
    %v348 = vmul.f32 %v332, 0.1
    %v349 = vadd.f32 %v301, %v333
    %v350 = vadd.f32 %v302, %v334
    %v351 = vadd.f32 %v303, %v335
    %v352 = vadd.f32 %v304, %v336
    %v353 = vadd.f32 %v305, %v337
    %v354 = vadd.f32 %v306, %v338
    %v355 = vadd.f32 %v307, %v339
    %v356 = vadd.f32 %v308, %v340
    %v357 = vadd.f32 %v309, %v341
    %v358 = vadd.f32 %v310, %v342
    %v359 = vadd.f32 %v311, %v343
    %v360 = vadd.f32 %v312, %v344
    %v361 = vadd.f32 %v313, %v345
    %v362 = vadd.f32 %v314, %v346
    %v363 = vadd.f32 %v315, %v347
    %v364 = vadd.f32 %v316, %v348
    %365 = vst [vmem:[%s3] sm:$0xff] %v349
    %366 = vst [vmem:[%s3 + $0x8] sm:$0xff] %v350
    %367 = vst [vmem:[%s3 + $0x10] sm:$0xff] %v351
    %368 = vst [vmem:[%s3 + $0x18] sm:$0xff] %v352
    %369 = vst [vmem:[%s3 + $0x20] sm:$0xff] %v353
    %370 = vst [vmem:[%s3 + $0x28] sm:$0xff] %v354
    %371 = vst [vmem:[%s3 + $0x30] sm:$0xff] %v355
    %372 = vst [vmem:[%s3 + $0x38] sm:$0xff] %v356
    %373 = vst [vmem:[%s3 + $0x40] sm:$0xff] %v357
    %374 = vst [vmem:[%s3 + $0x48] sm:$0xff] %v358
    %375 = vst [vmem:[%s3 + $0x50] sm:$0xff] %v359
    %376 = vst [vmem:[%s3 + $0x58] sm:$0xff] %v360
    %377 = vst [vmem:[%s3 + $0x60] sm:$0xff] %v361
    %378 = vst [vmem:[%s3 + $0x68] sm:$0xff] %v362
    %379 = vst [vmem:[%s3 + $0x70] sm:$0xff] %v363
    %380 = vst [vmem:[%s3 + $0x78] sm:$0xff] %v364
  $region18: #{appnp_conv.1} parent=0 // loop_footer
    %s51 = sadd.s32 1, %s47
  $region19: #{appnp_conv.1} parent=0 // loop_footer_branch
    %46 = sbr.rel target = $region15
  $region20: #{appnp_conv.1} parent=0 // loop_exit
    _
  // Predicated region
  $region21: #{appnp_conv.1} parent=0 // pred_check
    _
  $region22: #{appnp_conv.1} parent=0 // pred_check_branch
    %382 = sbr.rel (0) target = $region24
  $region23: #{appnp_conv.1} parent=0 // pred_region
    _
  $region24: #{appnp_conv.1} parent=0 // pred_fallthru
    _
  // Predicated region
  $region25: #{appnp_conv.1} parent=0 // pred_check
    _
  $region26: #{appnp_conv.1} parent=0 // pred_check_branch
    %384 = sbr.rel (0) target = $region28
  $region27: #{appnp_conv.1} parent=0 // pred_region
    _
  $region28: #{appnp_conv.1} parent=0 // pred_fallthru
    _

</llo_original>
